<compile_context>
chip_gen: v7x
topology: tpu7x:2x2x1
jax: 0.10.0
libtpu: 0.0.40
codegen_flags: <defaults>
</compile_context>

<pallas_src>
import functools

import jax
import jax.numpy as jnp
from jax.experimental import pallas as pl
from jax.experimental.pallas import tpu as pltpu


def _wce_kernel(logits_ref, labels_ref, out_ref, *, gamma, n_rows, tile_n):
    # One (TILE_N, C) row-block per grid step.
    x = logits_ref[...].astype(jnp.float32)          # (TILE_N, C) compute in f32
    lbl = labels_ref[...]                            # (TILE_N, 1) int32

    # Numerically-stable log-sum-exp per row.
    m = jnp.max(x, axis=-1, keepdims=True)                                   # (TILE_N, 1)
    lse = m + jnp.log(jnp.sum(jnp.exp(x - m), axis=-1, keepdims=True))       # (TILE_N, 1)

    # Logit at the label index: masked reduce instead of a materialized one-hot multiply.
    col = jax.lax.broadcasted_iota(jnp.int32, x.shape, 1)                    # (TILE_N, C)
    z_true = jnp.sum(jnp.where(col == lbl, x, 0.0), axis=-1, keepdims=True)  # (TILE_N, 1)

    ce = lse - z_true                                 # -log softmax[label]
    # p_true = exp(-ce)  =>  p_true**gamma = exp(-gamma * ce): single EUP op per row.
    weight = jnp.exp(jnp.float32(-gamma) * ce)
    loss = weight * ce                                # (TILE_N, 1)

    # Mask padded rows of the remainder block (select, so garbage/NaN rows are discarded).
    row = pl.program_id(0) * tile_n + jax.lax.broadcasted_iota(jnp.int32, loss.shape, 0)
    loss = jnp.where(row < n_rows, loss, 0.0)

    # Per-block partial sum; mean is finished in the wrapper.
    out_ref[...] = jnp.sum(loss).reshape(1, 1, 1)


def wce_loss(logits, labels, gamma=0.2, tile_n=512):
    """Pallas implementation of WCELoss.forward. logits: (N, C) float; labels: (N,) int."""
    N, C = logits.shape
    labels2d = labels.astype(jnp.int32).reshape(N, 1)

    # Block second-to-last dim must be a multiple of 8 or equal to the full dim.
    if N <= tile_n:
        tile_n = N                      # single block: always a legal block shape
    # else: tile_n (default 512) is a multiple of 8; last block is padded + masked.

    num_blocks = pl.cdiv(N, tile_n)

    cost = pl.CostEstimate(
        flops=5 * N * C,
        transcendentals=N * C + 2 * N,
        bytes_accessed=N * C * logits.dtype.itemsize + N * 4 + num_blocks * 4,
    )

    partials = pl.pallas_call(
        functools.partial(_wce_kernel, gamma=gamma, n_rows=N, tile_n=tile_n),
        out_shape=jax.ShapeDtypeStruct((num_blocks, 1, 1), jnp.float32),
        grid=(num_blocks,),
        in_specs=[
            # logits streamed in their ORIGINAL dtype; cast to f32 inside the kernel.
            pl.BlockSpec((tile_n, C), lambda i: (i, 0)),
            pl.BlockSpec((tile_n, 1), lambda i: (i, 0)),
        ],
        out_specs=pl.BlockSpec((1, 1, 1), lambda i: (i, 0, 0)),
        compiler_params=pltpu.CompilerParams(
            # Independent row blocks -> both v7x TensorCores stream data; no-op on v5e/v6e.
            dimension_semantics=("parallel",),
            # vmem_limit_bytes can be raised on v6e to sweep larger tiles; defaults are ample
            # for tile_n<=512 and moderate C, and safe on v7x's 64 MiB VMEM.
        ),
        cost_estimate=cost,
    )(logits, labels2d)

    return jnp.sum(partials) / jnp.float32(N)


def _wce_loss_ref(logits, labels, gamma=0.2):
    # Pure-JAX reference for verification.
    logits = logits.astype(jnp.float32)
    lse = jax.scipy.special.logsumexp(logits, axis=1)
    z_true = jnp.take_along_axis(logits, labels[:, None], axis=1)[:, 0]
    ce = lse - z_true
    p_true = jnp.exp(z_true - lse)
    return jnp.mean((p_true ** gamma) * ce)


if __name__ == "__main__":
    key = jax.random.PRNGKey(0)
    k1, k2, k3, k4 = jax.random.split(key, 4)

    # Small primary case (single block path): batch=8, classes=32.
    N, C = 8, 32
    logits = jax.random.normal(k1, (N, C), dtype=jnp.float32)
    labels = jax.random.randint(k2, (N,), 0, C, dtype=jnp.int32)
    loss = wce_loss(logits, labels, gamma=0.2)
    jax.block_until_ready(loss)
    ref = _wce_loss_ref(logits, labels, gamma=0.2)
    assert jnp.allclose(loss, ref, rtol=1e-5, atol=1e-5), (loss, ref)

    # Multi-block case exercising the grid + remainder-row masking (N=200, tile_n=64 -> 4 blocks).
    N2, C2 = 200, 32
    logits2 = jax.random.normal(k3, (N2, C2), dtype=jnp.float32)
    labels2 = jax.random.randint(k4, (N2,), 0, C2, dtype=jnp.int32)
    loss2 = wce_loss(logits2, labels2, gamma=0.2, tile_n=64)
    jax.block_until_ready(loss2)
    ref2 = _wce_loss_ref(logits2, labels2, gamma=0.2)
    assert jnp.allclose(loss2, ref2, rtol=1e-5, atol=1e-5), (loss2, ref2)

    print("KERNEL_OK")
</pallas_src>

<mosaic_0001>
module attributes {stable_mosaic.version = 11 : i64} {
  func.func @_wce_kernel(%arg0: i32, %arg1: memref<8x32xf32, #tpu.memory_space<vmem>>, %arg2: memref<8x1xi32, #tpu.memory_space<vmem>>, %arg3: memref<1x1x1xf32, #tpu.memory_space<vmem>>) attributes {dimension_semantics = [#tpu.dimension_semantics<parallel>], iteration_bounds = array<i64: 1>, scalar_prefetch = 0 : i64, scratch_operands = 0 : i64, tpu.core_type = #tpu.core_type<tc>, window_params = [{transform_indices = @transform_0, window_bounds = array<i64: 8, 32>}, {transform_indices = @transform_1, window_bounds = array<i64: 8, 1>}, {transform_indices = @transform_2, window_bounds = array<i64: 1, 1, 1>}]} {
    %c0 = arith.constant 0 : index
    %c0_0 = arith.constant 0 : index
    %0 = vector.load %arg1[%c0, %c0_0] : memref<8x32xf32, #tpu.memory_space<vmem>>, vector<8x32xf32>
    %c0_1 = arith.constant 0 : index
    %c0_2 = arith.constant 0 : index
    %1 = vector.load %arg2[%c0_1, %c0_2] : memref<8x1xi32, #tpu.memory_space<vmem>>, vector<8x1xi32>
    %cst = arith.constant dense<0xFF800000> : vector<8xf32>
    %2 = vector.multi_reduction <maximumf>, %0, %cst [1] : vector<8x32xf32> to vector<8xf32>
    %3 = vector.shape_cast %2 : vector<8xf32> to vector<8x1xf32>
    %4 = vector.broadcast %3 : vector<8x1xf32> to vector<8x32xf32>
    %5 = arith.subf %0, %4 : vector<8x32xf32>
    %6 = math.exp %5 : vector<8x32xf32>
    %cst_3 = arith.constant dense<0.000000e+00> : vector<8xf32>
    %7 = vector.multi_reduction <add>, %6, %cst_3 [1] : vector<8x32xf32> to vector<8xf32>
    %8 = vector.shape_cast %7 : vector<8xf32> to vector<8x1xf32>
    %9 = math.log %8 : vector<8x1xf32>
    %10 = arith.addf %3, %9 : vector<8x1xf32>
    %11 = tpu.iota {dimensions = array<i32: 1>} : vector<8x32xi32>
    %12 = vector.broadcast %1 : vector<8x1xi32> to vector<8x32xi32>
    %13 = arith.cmpi eq, %11, %12 : vector<8x32xi32>
    %cst_4 = arith.constant 0.000000e+00 : f32
    %14 = vector.broadcast %cst_4 : f32 to vector<8x32xf32>
    %15 = arith.select %13, %0, %14 : vector<8x32xi1>, vector<8x32xf32>
    %cst_5 = arith.constant dense<0.000000e+00> : vector<8xf32>
    %16 = vector.multi_reduction <add>, %15, %cst_5 [1] : vector<8x32xf32> to vector<8xf32>
    %17 = vector.shape_cast %16 : vector<8xf32> to vector<8x1xf32>
    %18 = arith.subf %10, %17 : vector<8x1xf32>
    %cst_6 = arith.constant -2.000000e-01 : f32
    %19 = vector.broadcast %cst_6 : f32 to vector<8x1xf32>
    %20 = arith.mulf %19, %18 : vector<8x1xf32>
    %21 = math.exp %20 : vector<8x1xf32>
    %22 = arith.mulf %21, %18 : vector<8x1xf32>
    %c8_i32 = arith.constant 8 : i32
    %23 = arith.muli %arg0, %c8_i32 : i32
    %24 = tpu.iota {dimensions = array<i32: 0>} : vector<8x1xi32>
    %25 = vector.broadcast %23 : i32 to vector<8x1xi32>
    %26 = arith.addi %25, %24 : vector<8x1xi32>
    %c8_i32_7 = arith.constant 8 : i32
    %27 = vector.broadcast %c8_i32_7 : i32 to vector<8x1xi32>
    %28 = arith.cmpi slt, %26, %27 : vector<8x1xi32>
    %cst_8 = arith.constant 0.000000e+00 : f32
    %29 = vector.broadcast %cst_8 : f32 to vector<8x1xf32>
    %30 = arith.select %28, %22, %29 : vector<8x1xi1>, vector<8x1xf32>
    %31 = vector.shape_cast %30 : vector<8x1xf32> to vector<1x8x1xf32>
    %cst_9 = arith.constant dense<0.000000e+00> : vector<1xf32>
    %32 = vector.multi_reduction <add>, %31, %cst_9 [1, 2] : vector<1x8x1xf32> to vector<1xf32>
    %33 = vector.shape_cast %32 : vector<1xf32> to vector<1x1x1xf32>
    %34 = vector.extract %33[0, 0, 0] : f32 from vector<1x1x1xf32>
    %35 = vector.broadcast %34 : f32 to vector<1x1x1xf32>
    %c0_10 = arith.constant 0 : index
    %c0_11 = arith.constant 0 : index
    %c0_12 = arith.constant 0 : index
    %36 = vector.load %arg3[%c0_10, %c0_11, %c0_12] : memref<1x1x1xf32, #tpu.memory_space<vmem>>, vector<1x1x1xf32>
    tpu.vector_store %arg3[%c0_10, %c0_11, %c0_12], %35 {strides = array<i32>} : memref<1x1x1xf32, #tpu.memory_space<vmem>>, vector<1x1x1xf32>,
    return
  }
  func.func @transform_0(%arg0: i32) -> (i32, i32) {
    %c0_i32 = arith.constant 0 : i32
    %c0_i32_0 = arith.constant 0 : i32
    return %arg0, %c0_i32 : i32, i32
  }
  func.func @transform_1(%arg0: i32) -> (i32, i32) {
    %c0_i32 = arith.constant 0 : i32
    %c0_i32_0 = arith.constant 0 : i32
    return %arg0, %c0_i32 : i32, i32
  }
  func.func @transform_2(%arg0: i32) -> (i32, i32, i32) {
    %c0_i32 = arith.constant 0 : i32
    %c0_i32_0 = arith.constant 0 : i32
    %c0_i32_1 = arith.constant 0 : i32
    return %arg0, %c0_i32, %c0_i32_0 : i32, i32, i32
  }
}

</mosaic_0001>

<llo_original>
// kernel: tpu_custom_call.1
$region0: #{tpu_custom_call.1}
  #allocation0 [shape = 'u32[]', space=smem, size = 0x4, offset = 0x4, fixed_abs, tag = 'smem constant byte address 0x4 - core index']
  #allocation1 [shape = 'u32[144,128]{1,0:T(1,128)}', space=vmem, size = 0x12000, scoped, tag = 'internal scratch']
  %s0 = inlined_call_operand.vmem [shape: f32[8,32], index: 0, kind: input, shape index: {}]
  %s1 = inlined_call_operand.vmem [shape: s32[8,1], index: 1, kind: input, shape index: {}]
  %s2 = inlined_call_operand.hbm [shape: f32[1,1,1], index: 2, kind: output, shape index: {}]
  %s3 = sld [smem:[#allocation0]]
  $region18: #{tpu_custom_call.1} parent=0
    _
  %s5 = ssub.s32 1, %s3
  %s6 = scalar_select 0, %s5, %s3
  $region1: #{tpu_custom_call.1} parent=0
    #allocation2 [shape = 'u8[512]{0}', space=vmem, size = 0x400, scoped, tag = 'output window, operand 0, single buffered']
    #allocation3 [shape = 's32[1]{0}', space=sflag, size = 0x4, scoped, tag = 'scoped memory for tpu_custom_call.1']
    %7 = vsyncpa [#allocation3], 0
    // Predicated region
    $region2: #{tpu_custom_call.1} parent=1 // pred_check
      _
    $region3: #{tpu_custom_call.1} parent=1 // pred_check_branch
      %9 = sbr.rel (0) target = $region5
    $region4: #{tpu_custom_call.1} parent=1 // pred_region
      _
    $region5: #{tpu_custom_call.1} parent=1 // pred_fallthru
      _
    // Predicated region
    $region6: #{tpu_custom_call.1} parent=1 // pred_check
      _
    $region7: #{tpu_custom_call.1} parent=1 // pred_check_branch
      %11 = sbr.rel (0) target = $region9
    $region8: #{tpu_custom_call.1} parent=1 // pred_region
      _
    $region9: #{tpu_custom_call.1} parent=1 // pred_fallthru
      _
    %v12 = vld [vmem:[%s0] sm:$0xff]
    %v13 = vld [vmem:[%s1] sm:$0xff]
    %vm14 = vcmask 261120
    %v15 = vsel %vm14, %v12, -inf
    %16 = vmax.xlane.f32.xlu0 %v15
    %v17 = vpop.xlane.xlu0 %16
    %v18 = vsub.f32 %v12, %v17
    %v19 = vmul.f32 %v18, 1.442695
    %v20 = vpow.pop %v19
    %v21 = vsel %vm14, %v20, 0.0
    %22 = vadd.xlane.f32.xlu0 %v21
    %v23 = vpop.xlane.xlu0 %22
    %v24 = vlog2.pop %v23
    %v25 = vmul.f32 %v24, 0.6931472
    %v26 = vadd.f32 %v17, %v25
    %v27 = vlaneseq
    %v28 = vand.u32 %v27, 127
    %29 = vset.pattern.permute.xlu0 0
    %30 = vperm.xlu0 %29, %v13
    %v31 = vpop.permute.xlu0 %30
    %vm32 = vcmp.eq.s32.totalorder %v28, %v31
    %v33 = vsel %vm32, %v12, 0.0
    %v34 = vsel %vm14, %v33, 0.0
    %35 = vadd.xlane.f32.xlu0 %v34
    %v36 = vpop.xlane.xlu0 %35
    %v37 = vsub.f32 %v26, %v36
    %v38 = vmul.f32 %v37, -0.2
    %v39 = vmul.f32 %v38, 1.442695
    %v40 = vpow.pop %v39
    %v41 = vmul.f32 %v40, %v37
    %s42 = smul.u32 0, 8
    %v43 = vlaneseq
    %v44 = vshrl.u32 %v43, 7
    %v45 = vstv %s42
    %v46 = vadd.s32 %v45, %v44
    %vm47 = vcmp.lt.s32.totalorder %v46, 8
    %v48 = vsel %vm47, %v41, 0.0
    %vm49 = vcmask 7168
    %v50 = vsel %vm49, %v48, 0.0
    %51 = vadd.xlane.f32.xlu0 %v50
    %v52 = vpop.xlane.xlu0 %51
    %v53 = vrot.slane %v52, 4
    %v54 = vadd.f32 %v52, %v53
    %v55 = vrot.slane %v54, 2
    %v56 = vadd.f32 %v54, %v55
    %v57 = vrot.slane %v56, 1
    %v58 = vadd.f32 %v56, %v57
    %s59 = vtos %v58
    %v60 = vstv %s59
    %vm61 = vcmask 0
    %62 = vst.msk [vmem:[#allocation2] sm:$0x1] %vm61, %v60
    // Predicated region
    $region10: #{tpu_custom_call.1} parent=1 // pred_check
      _
    $region11: #{tpu_custom_call.1} parent=1 // pred_check_branch
      %64 = sbr.rel (0) target = $region13
    $region12: #{tpu_custom_call.1} parent=1 // pred_region
      %s66 = ssub.s32 16, 16
      %67 = vsyncadd [#allocation3], %s66
      %s69 = sshll.u32 [#allocation2], 4
      %s70 = int_to_ptr.vmem [resolvable:$true] %s69
      %72 = dma.vmem_to_hbm [thread:$0]  %s70, 16, %s2, [#allocation3]
    $region13: #{tpu_custom_call.1} parent=1 // pred_fallthru
      _
    // Predicated region
    $region14: #{tpu_custom_call.1} parent=1 // pred_check
      _
    $region15: #{tpu_custom_call.1} parent=1 // pred_check_branch
      %74 = sbr.rel (0) target = $region17
    $region16: #{tpu_custom_call.1} parent=1 // pred_region
      %75 = dma.done [#allocation3], 16
    $region17: #{tpu_custom_call.1} parent=1 // pred_fallthru
      _
    %76 = vsyncpa [#allocation3], 1

</llo_original>
